<compile_context>
chip_gen: v6e
topology: v6e:2x2x1
jax: 0.10.0
libtpu: 0.0.40
codegen_flags: <defaults>
</compile_context>

<pallas_src>
import functools
import math

import jax
import jax.numpy as jnp
from jax.experimental import pallas as pl
from jax.experimental.pallas import tpu as pltpu


def make_pe_table(max_len: int, d_model: int) -> jnp.ndarray:
    """(max_len, d_model) sinusoidal PE table, matching the PyTorch __init__."""
    position = jnp.arange(max_len, dtype=jnp.float32)[:, None]              # (L, 1)
    div_term = jnp.exp(
        jnp.arange(0, d_model, 2, dtype=jnp.float32) * (-math.log(10000.0) / d_model)
    )                                                                        # (D/2,)
    ang = position * div_term                                                # (L, D/2)
    pe = jnp.zeros((max_len, d_model), dtype=jnp.float32)
    pe = pe.at[:, 0::2].set(jnp.sin(ang))
    pe = pe.at[:, 1::2].set(jnp.cos(ang))
    return pe


# -----------------------------------------------------------------------------
# Kernels. x/out tiles are (block_rows, Cp) with Cp a 128-multiple; pe tile is
# (block_rows, pe_width) with pe_width a 128-multiple dividing Cp, replicated
# across batch in-kernel (whole-vreg lane replication).
# -----------------------------------------------------------------------------

def _pe_eval_kernel(x_ref, pe_ref, out_ref, *, rep: int):
    pe = pe_ref[...]
    if rep > 1:
        pe = jnp.tile(pe, (1, rep))
    out_ref[...] = x_ref[...] + pe


def _pe_dropout_bits_kernel(x_ref, pe_ref, bits_ref, out_ref, *,
                            rep: int, threshold: int, inv_keep: float):
    pe = pe_ref[...]
    if rep > 1:
        pe = jnp.tile(pe, (1, rep))
    y = x_ref[...] + pe
    keep = bits_ref[...] < jnp.uint32(threshold)          # integer threshold compare
    scale = jnp.asarray(inv_keep, dtype=y.dtype)
    out_ref[...] = jnp.where(keep, y * scale, jnp.zeros_like(y))


def _pe_dropout_prng_kernel(seed_ref, x_ref, pe_ref, out_ref, *,
                            rep: int, threshold: int, inv_keep: float):
    pe = pe_ref[...]
    if rep > 1:
        pe = jnp.tile(pe, (1, rep))
    y = x_ref[...] + pe
    # Decorrelate tiles: feed (user seed, tile id) as two independent seed words
    # instead of consecutive integer seeds.
    pltpu.prng_seed(seed_ref[0], pl.program_id(0))
    bits = pltpu.bitcast(pltpu.prng_random_bits(y.shape), jnp.uint32)
    keep = bits < jnp.uint32(threshold)                   # integer threshold compare
    scale = jnp.asarray(inv_keep, dtype=y.dtype)
    out_ref[...] = jnp.where(keep, y * scale, jnp.zeros_like(y))
    # TODO(synk): if v7x bundle dumps show this path VPU/PRNG-bound, draw one
    # uint32 per 4 elements and compare per-byte thresholds to cut PRNG cost 4x.


# -----------------------------------------------------------------------------
# Generation-aware tiling / VMEM budgeting.
# -----------------------------------------------------------------------------

# (per x/out tile target bytes, vmem_limit ceiling we are willing to request)
_GEN_BUDGETS = {
    "v5e":     (3 << 20, 96 << 20),    # 128 MiB physical, small default scoped VMEM
    "v6e":     (8 << 20, 100 << 20),   # 128 MiB physical
    "v7x":     (5 << 20, 56 << 20),    # only 64 MiB physical per TC
    "unknown": (4 << 20, 56 << 20),    # budget for the smallest (v7x) case
}


def _tpu_generation() -> str:
    try:
        kind = jax.devices()[0].device_kind.lower()
    except Exception:
        return "unknown"
    if "v5 lite" in kind or "v5lite" in kind or "v5e" in kind:
        return "v5e"
    if "v6" in kind:
        return "v6e"
    if "7" in kind:
        return "v7x"
    return "unknown"


def _round_up(n: int, m: int) -> int:
    return -(-n // m) * m


def _choose_block_rows(n_rows: int, row_bytes: int, per_tile_target: int,
                       sublane: int) -> int:
    """Sublane-aligned row tile: as big as the per-tile VMEM target allows, while
    keeping >= 4 grid steps (pipelining + both v7x TCs) and preferring an even
    step count.  Single-block only for trivially small inputs."""
    rows = max(sublane, (per_tile_target // max(row_bytes, 1)) // sublane * sublane)
    rows = min(rows, _round_up(n_rows, sublane))          # never exceed the array
    min_grid = 4
    if n_rows >= min_grid * sublane:
        rows = min(rows, max(sublane, (n_rows // min_grid) // sublane * sublane))
    grid = pl.cdiv(n_rows, rows)
    if grid > 1 and grid % 2 == 1:                        # prefer even TC split
        alt = max(sublane, _round_up(pl.cdiv(n_rows, grid + 1), sublane))
        if pl.cdiv(n_rows, alt) % 2 == 0:
            rows = alt
    return int(rows)


# -----------------------------------------------------------------------------
# Wrapper.
# -----------------------------------------------------------------------------

def positional_encoding_forward(x, pe_table, *, p_drop=0.1, training=False, seed=0,
                                block_rows=None, donate_x=False):
    """x: (S, B, D) array. Returns dropout(x + pe[:S]) with the module semantics."""
    S, B, D = x.shape
    C = B * D
    dtype = x.dtype
    itemsize = jnp.dtype(dtype).itemsize
    # Native sublane packing: 8 rows for 4-byte, 16 for bf16, 32 for int8/fp8.
    sublane = 8 * max(1, 4 // itemsize)

    # Lane-dense layout: fold (B, D) into lanes and pad to a 128 multiple so
    # output stores are unmasked full-width vst.
    Cp = _round_up(C, 128)
    padded = Cp != C
    x2 = x.reshape(S, C)
    if padded:
        x2 = jnp.pad(x2, ((0, 0), (0, Cp - C)))

    # pe: keep small in HBM (traffic independent of batch), lane-aligned so the
    # in-kernel batch replication is whole-128-lane vreg copies.
    L = math.lcm(D, 128)
    pe_width = L if (Cp % L == 0) else Cp   # rare misaligned case: full pre-tile
    pe_wide = jnp.tile(pe_table[:S].astype(dtype),
                       (1, -(-pe_width // D)))[:, :pe_width]          # (S, pe_width)
    rep = Cp // pe_width

    gen = _tpu_generation()
    per_tile_target, vmem_ceiling = _GEN_BUDGETS.get(gen, _GEN_BUDGETS["unknown"])
    if block_rows is None:
        block_rows = _choose_block_rows(S, Cp * itemsize, per_tile_target, sublane)
    grid = (pl.cdiv(S, block_rows),)

    x_spec = pl.BlockSpec((block_rows, Cp), lambda i: (i, 0))
    pe_spec = pl.BlockSpec((block_rows, pe_width), lambda i: (i, 0))
    out_spec = pl.BlockSpec((block_rows, Cp), lambda i: (i, 0))
    out_shape = jax.ShapeDtypeStruct((S, Cp), dtype)

    on_tpu = jax.default_backend() == "tpu"
    use_dropout = bool(training) and float(p_drop) > 0.0
    needs_bits_stream = use_dropout and not on_tpu

    # Pipeline holds 2x(x tile) + 2x(out tile) + 2x(pe tile) [+ 2x(bits tile)].
    tile_x = block_rows * Cp * itemsize
    tile_pe = block_rows * pe_width * itemsize
    tile_bits = block_rows * Cp * 4 if needs_bits_stream else 0
    needed = 2 * (2 * tile_x) + 2 * tile_pe + 2 * tile_bits
    vmem_limit = int(min(vmem_ceiling, max(32 << 20, int(needed * 1.3) + (2 << 20))))

    extra = {}
    if on_tpu:
        # Independent row tiles -> shard the grid across both v7x TensorCores;
        # explicit VMEM limit sized for the double-buffered pipeline.
        extra["compiler_params"] = pltpu.CompilerParams(
            dimension_semantics=("parallel",),
            vmem_limit_bytes=vmem_limit)

    if not use_dropout:
        kernel = functools.partial(_pe_eval_kernel, rep=rep)
        alias = {0: 0} if donate_x else {}
        out2 = pl.pallas_call(
            kernel, grid=grid,
            in_specs=[x_spec, pe_spec], out_specs=out_spec,
            out_shape=out_shape, input_output_aliases=alias, **extra,
        )(x2, pe_wide)
    else:
        keep_prob = 1.0 - float(p_drop)
        # Clamp introduces a <=2^-32 keep-probability bias (negligible).
        threshold = min(int(round(keep_prob * (1 << 32))), (1 << 32) - 1)
        inv_keep = 1.0 / keep_prob
        if on_tpu:
            # On-chip hardware PRNG: no extra HBM stream for the dropout bits.
            seed_arr = jnp.asarray([seed], dtype=jnp.int32)
            kernel = functools.partial(_pe_dropout_prng_kernel, rep=rep,
                                       threshold=threshold, inv_keep=inv_keep)
            alias = {1: 0} if donate_x else {}
            out2 = pl.pallas_call(
                kernel, grid=grid,
                in_specs=[pl.BlockSpec(memory_space=pltpu.MemorySpace.SMEM),
                          x_spec, pe_spec],
                out_specs=out_spec, out_shape=out_shape,
                input_output_aliases=alias, **extra,
            )(seed_arr, x2, pe_wide)
        else:
            # Portable fallback (interpret / non-TPU backends): stream uint32 bits.
            bits = jax.random.bits(jax.random.PRNGKey(seed), (S, Cp), dtype=jnp.uint32)
            bits_spec = pl.BlockSpec((block_rows, Cp), lambda i: (i, 0))
            kernel = functools.partial(_pe_dropout_bits_kernel, rep=rep,
                                       threshold=threshold, inv_keep=inv_keep)
            alias = {0: 0} if donate_x else {}
            out2 = pl.pallas_call(
                kernel, grid=grid,
                in_specs=[x_spec, pe_spec, bits_spec], out_specs=out_spec,
                out_shape=out_shape, input_output_aliases=alias, **extra,
            )(x2, pe_wide, bits)

    if padded:
        out2 = out2[:, :C]
    return out2.reshape(S, B, D)


if __name__ == "__main__":
    # Small shapes consistent with the module: seq=8, batch=2, d_model=32.
    S, B, D = 8, 2, 32
    MAX_LEN = 500

    key = jax.random.PRNGKey(0)
    x = jax.random.normal(key, (S, B, D), dtype=jnp.float32)

    pe_table = make_pe_table(MAX_LEN, D)
    ref = x + pe_table[:S][:, None, :]

    # Eval mode (dropout = identity): must match the pure-JAX reference.
    out_eval = positional_encoding_forward(x, pe_table, p_drop=0.1, training=False)
    out_eval = jax.block_until_ready(out_eval)
    assert out_eval.shape == (S, B, D)
    assert jnp.allclose(out_eval, ref, atol=1e-5, rtol=1e-5), "eval-mode mismatch"

    # Training mode: every element is either 0 (dropped) or ref / keep_prob (kept).
    out_train = positional_encoding_forward(x, pe_table, p_drop=0.1, training=True,
                                            seed=42)
    out_train = jax.block_until_ready(out_train)
    keep_prob = 0.9
    scaled = out_train * keep_prob
    ok = jnp.logical_or(jnp.abs(out_train) < 1e-6, jnp.abs(scaled - ref) < 1e-4)
    assert bool(jnp.all(ok)), "training-mode dropout semantics mismatch"

    print("KERNEL_OK")
</pallas_src>

<mosaic_0001>
module attributes {stable_mosaic.version = 11 : i64} {
  func.func @_pe_eval_kernel(%arg0: i32, %arg1: memref<8x128xf32, #tpu.memory_space<vmem>>, %arg2: memref<8x128xf32, #tpu.memory_space<vmem>>, %arg3: memref<8x128xf32, #tpu.memory_space<vmem>>) attributes {dimension_semantics = [#tpu.dimension_semantics<arbitrary>], iteration_bounds = array<i64: 1>, scalar_prefetch = 0 : i64, scratch_operands = 0 : i64, tpu.core_type = #tpu.core_type<tc>, window_params = [{transform_indices = @transform_0, window_bounds = array<i64: 8, 128>}, {transform_indices = @transform_1, window_bounds = array<i64: 8, 128>}, {transform_indices = @transform_2, window_bounds = array<i64: 8, 128>}]} {
    %c0 = arith.constant 0 : index
    %c0_0 = arith.constant 0 : index
    %0 = vector.load %arg2[%c0, %c0_0] : memref<8x128xf32, #tpu.memory_space<vmem>>, vector<8x128xf32>
    %c0_1 = arith.constant 0 : index
    %c0_2 = arith.constant 0 : index
    %1 = vector.load %arg1[%c0_1, %c0_2] : memref<8x128xf32, #tpu.memory_space<vmem>>, vector<8x128xf32>
    %2 = arith.addf %1, %0 : vector<8x128xf32>
    %c0_3 = arith.constant 0 : index
    %c0_4 = arith.constant 0 : index
    %3 = vector.load %arg3[%c0_3, %c0_4] : memref<8x128xf32, #tpu.memory_space<vmem>>, vector<8x128xf32>
    tpu.vector_store %arg3[%c0_3, %c0_4], %2 {strides = array<i32>} : memref<8x128xf32, #tpu.memory_space<vmem>>, vector<8x128xf32>,
    return
  }
  func.func @transform_0(%arg0: i32) -> (i32, i32) {
    %c0_i32 = arith.constant 0 : i32
    %c0_i32_0 = arith.constant 0 : i32
    return %arg0, %c0_i32 : i32, i32
  }
  func.func @transform_1(%arg0: i32) -> (i32, i32) {
    %c0_i32 = arith.constant 0 : i32
    %c0_i32_0 = arith.constant 0 : i32
    return %arg0, %c0_i32 : i32, i32
  }
  func.func @transform_2(%arg0: i32) -> (i32, i32) {
    %c0_i32 = arith.constant 0 : i32
    %c0_i32_0 = arith.constant 0 : i32
    return %arg0, %c0_i32 : i32, i32
  }
}

</mosaic_0001>

<llo_original>
// kernel: tpu_custom_call.1
$region0: #{tpu_custom_call.1}
  #allocation0 [shape = 'u32[]', space=smem, size = 0x4, offset = 0x4, fixed_abs, tag = 'smem constant byte address 0x4 - core index']
  #allocation1 [shape = 'u32[144,128]{1,0:T(1,128)}', space=vmem, size = 0x12000, scoped, tag = 'internal scratch']
  %s0 = inlined_call_operand.hbm [shape: f32[8,128], index: 0, kind: input, shape index: {}]
  %s1 = inlined_call_operand.hbm [shape: f32[8,128], index: 1, kind: input, shape index: {}]
  %s2 = inlined_call_operand.hbm [shape: f32[8,128], index: 2, kind: output, shape index: {}]
  %s3 = sld [smem:[#allocation0]]
  $region26: #{tpu_custom_call.1} parent=0
    _
  %s5 = ssub.s32 1, %s3
  %s6 = scalar_select 0, %s5, %s3
  $region1: #{tpu_custom_call.1} parent=0
    #allocation2 [shape = 'u8[4096]{0}', space=vmem, size = 0x1000, scoped, tag = 'input window, operand 0, single buffered']
    #allocation3 [shape = 's32[1]{0}', space=sflag, size = 0x4, scoped, tag = 'scoped memory for tpu_custom_call.1']
    #allocation4 [shape = 's32[1]{0}', space=sflag, size = 0x4, scoped, tag = 'scoped memory for tpu_custom_call.1']
    #allocation5 [shape = 'u8[4096]{0}', space=vmem, size = 0x1000, scoped, tag = 'input window, operand 1, single buffered']
    #allocation6 [shape = 's32[1]{0}', space=sflag, size = 0x4, scoped, tag = 'scoped memory for tpu_custom_call.1']
    #allocation7 [shape = 'u8[4096]{0}', space=vmem, size = 0x1000, scoped, tag = 'output window, operand 0, single buffered']
    %7 = vsyncpa [#allocation3], 0
    %8 = vsyncpa [#allocation6], 0
    %9 = vsyncpa [#allocation4], 0
    // Predicated region
    $region2: #{tpu_custom_call.1} parent=1 // pred_check
      _
    $region3: #{tpu_custom_call.1} parent=1 // pred_check_branch
      %11 = sbr.rel (0) target = $region5
    $region4: #{tpu_custom_call.1} parent=1 // pred_region
      %s13 = ssub.s32 128, 128
      %14 = vsyncadd [#allocation3], %s13
      %s16 = sshll.u32 [#allocation2], 4
      %s17 = int_to_ptr.vmem [resolvable:$true] %s16
      %19 = dma.hbm_to_vmem [thread:$0]  %s0, 128, %s17, [#allocation3]
    $region5: #{tpu_custom_call.1} parent=1 // pred_fallthru
      _
    // Predicated region
    $region6: #{tpu_custom_call.1} parent=1 // pred_check
      _
    $region7: #{tpu_custom_call.1} parent=1 // pred_check_branch
      %21 = sbr.rel (0) target = $region9
    $region8: #{tpu_custom_call.1} parent=1 // pred_region
      %s23 = ssub.s32 128, 128
      %24 = vsyncadd [#allocation6], %s23
      %s26 = sshll.u32 [#allocation5], 4
      %s27 = int_to_ptr.vmem [resolvable:$true] %s26
      %29 = dma.hbm_to_vmem [thread:$0]  %s1, 128, %s27, [#allocation6]
    $region9: #{tpu_custom_call.1} parent=1 // pred_fallthru
      _
    // Predicated region
    $region10: #{tpu_custom_call.1} parent=1 // pred_check
      _
    $region11: #{tpu_custom_call.1} parent=1 // pred_check_branch
      %31 = sbr.rel (0) target = $region13
    $region12: #{tpu_custom_call.1} parent=1 // pred_region
      %32 = dma.done [#allocation3], 128
    $region13: #{tpu_custom_call.1} parent=1 // pred_fallthru
      _
    // Predicated region
    $region14: #{tpu_custom_call.1} parent=1 // pred_check
      _
    $region15: #{tpu_custom_call.1} parent=1 // pred_check_branch
      %34 = sbr.rel (0) target = $region17
    $region16: #{tpu_custom_call.1} parent=1 // pred_region
      %35 = dma.done [#allocation6], 128
    $region17: #{tpu_custom_call.1} parent=1 // pred_fallthru
      _
    %v36 = vld [vmem:[#allocation5] sm:$0xff]
    %v37 = vld [vmem:[#allocation2] sm:$0xff]
    %v38 = vadd.f32 %v37, %v36
    %39 = vst [vmem:[#allocation7] sm:$0xff] %v38
    // Predicated region
    $region18: #{tpu_custom_call.1} parent=1 // pred_check
      _
    $region19: #{tpu_custom_call.1} parent=1 // pred_check_branch
      %41 = sbr.rel (0) target = $region21
    $region20: #{tpu_custom_call.1} parent=1 // pred_region
      %s43 = ssub.s32 128, 128
      %44 = vsyncadd [#allocation4], %s43
      %s46 = sshll.u32 [#allocation7], 4
      %s47 = int_to_ptr.vmem [resolvable:$true] %s46
      %49 = dma.vmem_to_hbm [thread:$0]  %s47, 128, %s2, [#allocation4]
    $region21: #{tpu_custom_call.1} parent=1 // pred_fallthru
      _
    // Predicated region
    $region22: #{tpu_custom_call.1} parent=1 // pred_check
      _
    $region23: #{tpu_custom_call.1} parent=1 // pred_check_branch
      %51 = sbr.rel (0) target = $region25
    $region24: #{tpu_custom_call.1} parent=1 // pred_region
      %52 = dma.done [#allocation4], 128
    $region25: #{tpu_custom_call.1} parent=1 // pred_fallthru
      _
    %53 = vsyncpa [#allocation3], 1
    %54 = vsyncpa [#allocation6], 1
    %55 = vsyncpa [#allocation4], 1

</llo_original>
